<compile_context>
chip_gen: v7x
topology: tpu7x:2x2x1
jax: 0.10.0
libtpu: 0.0.40
codegen_flags: <defaults>
</compile_context>

<pallas_src>
import math

import jax
import jax.numpy as jnp
from jax.experimental import pallas as pl
from jax.experimental.pallas import tpu as pltpu

EPS = 1e-5            # torch.nn.LayerNorm default
_LANE = 128
_SUBLANE = 8

_VMEM_LIMIT = None      # cached, generation-aware compiler VMEM limit
_BUFFERED1_OK = None    # cached one-time capability probe for pl.Buffered(1)


def _round_up(v, m):
    return (v + m - 1) // m * m


def _vmem_limit_bytes():
    """~75% of physical (per-TC) VMEM; conservative fallback fits v7x's 64 MiB."""
    global _VMEM_LIMIT
    if _VMEM_LIMIT is None:
        try:
            cap = int(pltpu.get_tpu_info().vmem_capacity_bytes)
        except Exception:
            cap = 0
        if cap <= 0:
            cap = 64 * 1024 * 1024          # v7x physical per-TC VMEM
        _VMEM_LIMIT = (cap * 3) // 4        # ~48 MiB v7x, ~96 MiB v5e/v6e
    return _VMEM_LIMIT


def _vmem_budget_bytes():
    # Working-set target: leave headroom under the compiler limit.
    return (_vmem_limit_bytes() * 5) // 6


def _buffered1_supported():
    """One-time probe: does this Pallas build accept pipeline_mode=pl.Buffered(1)
    on a grid-invariant BlockSpec?  (Single tiny compile, cached.)"""
    global _BUFFERED1_OK
    if _BUFFERED1_OK is not None:
        return _BUFFERED1_OK
    try:
        def _probe(a_ref, c_ref, o_ref):
            o_ref[...] = a_ref[...] + c_ref[...]

        z = jnp.zeros((_SUBLANE, _LANE), jnp.float32)
        out = pl.pallas_call(
            _probe,
            out_shape=jax.ShapeDtypeStruct((_SUBLANE, _LANE), jnp.float32),
            grid=(1,),
            in_specs=[
                pl.BlockSpec((_SUBLANE, _LANE), lambda i: (0, 0)),
                pl.BlockSpec((_SUBLANE, _LANE), lambda i: (0, 0),
                             pipeline_mode=pl.Buffered(1)),
            ],
            out_specs=pl.BlockSpec((_SUBLANE, _LANE), lambda i: (0, 0)),
        )(z, z)
        jax.block_until_ready(out)
        _BUFFERED1_OK = True
    except Exception:
        _BUFFERED1_OK = False
    return _BUFFERED1_OK


def _make_kernel(cout, cout_pad):
    """Fused y = x @ W + b ; LayerNorm(y) over the last (lane) axis."""
    masked = cout_pad != cout           # static; compiles away when Cout % 128 == 0
    inv_n = 1.0 / float(cout)

    def kernel(x_ref, w_ref, b_ref, g_ref, beta_ref, o_ref):
        # --- Linear on the MXU, f32 accumulation ---
        y = jnp.dot(x_ref[...], w_ref[...], preferred_element_type=jnp.float32)
        y = y + b_ref[...].astype(jnp.float32)
        if masked:
            valid = jax.lax.broadcasted_iota(jnp.int32, y.shape, 1) < cout
            y = jnp.where(valid, y, 0.0)   # padded cols contribute 0 to both sums

        # --- LayerNorm, one-pass stats (biased variance), all math in f32 ---
        s = jnp.sum(y, axis=-1, keepdims=True)
        sq = jnp.sum(y * y, axis=-1, keepdims=True)
        mu = s * inv_n
        var = jnp.maximum(sq * inv_n - mu * mu, 0.0)
        inv = jax.lax.rsqrt(var + EPS)
        out = (y - mu) * (inv * g_ref[...].astype(jnp.float32)) \
              + beta_ref[...].astype(jnp.float32)
        o_ref[...] = out.astype(o_ref.dtype)

    return kernel


def _pick_tile_b(n_rows, cin, cout_pad, x_bytes, out_bytes, w_bytes,
                 row_align, single_buffer):
    """Largest batch tile (multiple of row_align, <= 2048) whose streaming
    footprint fits the VMEM budget, additionally capped so the grid keeps
    >= ~4 steps (DMA/compute overlap + v7x dual-TC sharding)."""
    per_row = 2 * (cin * x_bytes + cout_pad * out_bytes)        # x + out, double-buffered
    w_bufs = 1 if single_buffer else 2
    resident = w_bufs * (cin * cout_pad * w_bytes + 3 * cout_pad * 4)
    avail = max(_vmem_budget_bytes() - resident, per_row * row_align)
    vmem_cap = max(row_align, (avail // per_row) // row_align * row_align)

    min_steps = 4
    steps_cap = _round_up(pl.cdiv(max(n_rows, 1), min_steps), row_align)
    full = _round_up(max(n_rows, 1), row_align)
    return max(row_align, min(2048, vmem_cap, steps_cap, full))


def _invariant_spec(shape, single_buffer):
    # Grid-invariant block: no point double-buffering it.
    if single_buffer:
        return pl.BlockSpec(shape, lambda i: (0, 0), pipeline_mode=pl.Buffered(1))
    return pl.BlockSpec(shape, lambda i: (0, 0))


def _call(x2, w, b2, g2, be2, tile_b, cout, out_dtype, single_buffer):
    n_rows, cin = x2.shape
    cout_pad = w.shape[1]
    grid = (pl.cdiv(n_rows, tile_b),)   # partial last block masked by Pallas
    return pl.pallas_call(
        _make_kernel(cout, cout_pad),
        out_shape=jax.ShapeDtypeStruct((n_rows, cout_pad), out_dtype),
        grid_spec=pltpu.PrefetchScalarGridSpec(
            num_scalar_prefetch=0,
            grid=grid,
            in_specs=[
                pl.BlockSpec((tile_b, cin), lambda i: (i, 0)),     # x tile (pipelined)
                _invariant_spec((cin, cout_pad), single_buffer),   # W
                _invariant_spec((1, cout_pad), single_buffer),     # bias
                _invariant_spec((1, cout_pad), single_buffer),     # gamma
                _invariant_spec((1, cout_pad), single_buffer),     # beta
            ],
            out_specs=pl.BlockSpec((tile_b, cout_pad), lambda i: (i, 0)),
        ),
        compiler_params=pltpu.CompilerParams(
            dimension_semantics=("parallel",),   # batch tiles shard across TCs (v7x)
            vmem_limit_bytes=_vmem_limit_bytes(),
        ),
    )(x2, w, b2, g2, be2)


def linear_layernorm(x, w, b, gamma, beta, *, tile_b=None, mxu_dtype=None,
                     out_dtype=None):
    """CustomModel.forward: LayerNorm(Linear(x)).

    x: (*, Cin); w: (Cin, Cout); b/gamma/beta: (Cout,)  ->  (*, Cout).
    mxu_dtype: optional dtype (e.g. jnp.bfloat16) for the matmul operands
               (x, W); a valid fast path on v5e/v6e/v7x.  Accumulation and all
               LayerNorm math stay f32 regardless.
    out_dtype: output dtype (default x.dtype); pass jnp.bfloat16 to halve the
               dominant output HBM stream (semantics change for the caller).
    """
    cin = x.shape[-1]
    cout = w.shape[1]
    out_dtype = x.dtype if out_dtype is None else out_dtype
    lead_shape = x.shape[:-1]

    # Flatten leading dims: (*, Cin) -> (B, Cin).  No row padding: partial
    # batch blocks are masked inside the Pallas pipeline.
    x2 = x.reshape(-1, cin)
    n_rows = x2.shape[0]

    # Pad Cout to a lane-dense multiple of 128 (kernel masks the reduction so
    # the statistics stay over the true Cout columns).
    cout_pad = _round_up(cout, _LANE)
    if cout_pad != cout:
        w = jnp.pad(w, ((0, 0), (0, cout_pad - cout)))
        b = jnp.pad(b, (0, cout_pad - cout))
        gamma = jnp.pad(gamma, (0, cout_pad - cout))
        beta = jnp.pad(beta, (0, cout_pad - cout))

    # Optional bf16 MXU operands (halves the x and W HBM streams on all gens).
    if mxu_dtype is not None:
        x2 = x2.astype(mxu_dtype)
        w = w.astype(mxu_dtype)

    x_bytes = jnp.dtype(x2.dtype).itemsize
    w_bytes = jnp.dtype(w.dtype).itemsize
    out_bytes = jnp.dtype(out_dtype).itemsize
    row_align = 2 * _SUBLANE if x_bytes == 2 else _SUBLANE  # bf16 packs 16 rows/vreg

    single_buffer = _buffered1_supported()
    if tile_b is None:
        tile_b = _pick_tile_b(n_rows, cin, cout_pad, x_bytes, out_bytes,
                              w_bytes, row_align, single_buffer)
    tile_b = max(row_align, _round_up(tile_b, row_align))

    b2 = b.reshape(1, cout_pad).astype(jnp.float32)
    g2 = gamma.reshape(1, cout_pad).astype(jnp.float32)
    be2 = beta.reshape(1, cout_pad).astype(jnp.float32)

    out = _call(x2, w, b2, g2, be2, tile_b, cout, out_dtype, single_buffer)

    if cout_pad != cout:                     # column slice only when padding fired
        out = out[:, :cout]
    return out.reshape(*lead_shape, cout)


def reference(x, w, b, gamma, beta):
    y = jnp.einsum("...i,ij->...j", x, w) + b
    mu = jnp.mean(y, axis=-1, keepdims=True)
    var = jnp.mean((y - mu) ** 2, axis=-1, keepdims=True)
    return (y - mu) / jnp.sqrt(var + EPS) * gamma + beta


if __name__ == "__main__":
    in_channels, out_channels = 32, 128
    batch = 8

    key = jax.random.PRNGKey(0)
    kx, kx2, kx3, kw, kb = jax.random.split(key, 5)

    x = jax.random.normal(kx, (batch, in_channels), dtype=jnp.float32)

    # Deterministic parameter init (shapes from nn.Linear / nn.LayerNorm).
    bound = 1.0 / math.sqrt(in_channels)
    w = jax.random.uniform(kw, (in_channels, out_channels),
                           minval=-bound, maxval=bound, dtype=jnp.float32)
    b = jax.random.uniform(kb, (out_channels,),
                           minval=-bound, maxval=bound, dtype=jnp.float32)
    gamma = jnp.ones((out_channels,), dtype=jnp.float32)   # LayerNorm weight init
    beta = jnp.zeros((out_channels,), dtype=jnp.float32)   # LayerNorm bias init

    # 1) f32 MXU operands: tight correctness check.
    out = jax.block_until_ready(linear_layernorm(x, w, b, gamma, beta))
    ref = reference(x, w, b, gamma, beta)
    assert out.shape == (batch, out_channels)
    assert jnp.allclose(out, ref, atol=1e-4, rtol=1e-4)

    # 2) Arbitrary leading dims, row count not a multiple of 8 (exercises the
    #    no-pad partial-block path).
    x3 = jax.random.normal(kx2, (2, 3, in_channels), dtype=jnp.float32)
    out3 = jax.block_until_ready(linear_layernorm(x3, w, b, gamma, beta))
    ref3 = reference(x3, w, b, gamma, beta)
    assert out3.shape == (2, 3, out_channels)
    assert jnp.allclose(out3, ref3, atol=1e-4, rtol=1e-4)

    # 3) Multi-step grid with a partial final block (50 rows -> tile 16, 4 steps).
    xb = jax.random.normal(kx3, (50, in_channels), dtype=jnp.float32)
    outb = jax.block_until_ready(linear_layernorm(xb, w, b, gamma, beta))
    refb = reference(xb, w, b, gamma, beta)
    assert outb.shape == (50, out_channels)
    assert jnp.allclose(outb, refb, atol=1e-4, rtol=1e-4)

    # 4) Cout not a multiple of 128 (exercises the masked-reduction / padded-W path).
    co = 72
    outo = jax.block_until_ready(
        linear_layernorm(x, w[:, :co], b[:co], gamma[:co], beta[:co]))
    refo = reference(x, w[:, :co], b[:co], gamma[:co], beta[:co])
    assert outo.shape == (batch, co)
    assert jnp.allclose(outo, refo, atol=1e-4, rtol=1e-4)

    # 5) bf16 MXU operands (valid on v5e/v6e/v7x); LayerNorm math stays f32.
    out_bf16 = jax.block_until_ready(
        linear_layernorm(x, w, b, gamma, beta, mxu_dtype=jnp.bfloat16))
    assert jnp.allclose(out_bf16, ref, atol=5e-2, rtol=5e-2)

    # 6) bf16 output stream (out_dtype knob).
    out_bo = jax.block_until_ready(
        linear_layernorm(x, w, b, gamma, beta, mxu_dtype=jnp.bfloat16,
                         out_dtype=jnp.bfloat16))
    assert out_bo.dtype == jnp.bfloat16
    assert jnp.allclose(out_bo.astype(jnp.float32), ref, atol=6e-2, rtol=6e-2)

    print("KERNEL_OK")
</pallas_src>

<mosaic_0001>
module attributes {stable_mosaic.version = 11 : i64} {
  func.func @_probe(%arg0: i32, %arg1: memref<8x128xf32, #tpu.memory_space<vmem>>, %arg2: memref<8x128xf32, #tpu.memory_space<vmem>>, %arg3: memref<8x128xf32, #tpu.memory_space<vmem>>) attributes {dimension_semantics = [#tpu.dimension_semantics<arbitrary>], iteration_bounds = array<i64: 1>, scalar_prefetch = 0 : i64, scratch_operands = 0 : i64, tpu.core_type = #tpu.core_type<tc>, window_params = [{pipeline_mode = #tpu.pipeline_mode<synchronous>, transform_indices = @transform_0, window_bounds = array<i64: 8, 128>}, {pipeline_mode = #tpu.pipeline_mode<synchronous>, transform_indices = @transform_1, window_bounds = array<i64: 8, 128>}, {pipeline_mode = #tpu.pipeline_mode<synchronous>, transform_indices = @transform_2, window_bounds = array<i64: 8, 128>}]} {
    %c0 = arith.constant 0 : index
    %c0_0 = arith.constant 0 : index
    %0 = vector.load %arg1[%c0, %c0_0] : memref<8x128xf32, #tpu.memory_space<vmem>>, vector<8x128xf32>
    %c0_1 = arith.constant 0 : index
    %c0_2 = arith.constant 0 : index
    %1 = vector.load %arg2[%c0_1, %c0_2] : memref<8x128xf32, #tpu.memory_space<vmem>>, vector<8x128xf32>
    %2 = arith.addf %0, %1 : vector<8x128xf32>
    %c0_3 = arith.constant 0 : index
    %c0_4 = arith.constant 0 : index
    %3 = vector.load %arg3[%c0_3, %c0_4] : memref<8x128xf32, #tpu.memory_space<vmem>>, vector<8x128xf32>
    tpu.vector_store %arg3[%c0_3, %c0_4], %2 {strides = array<i32>} : memref<8x128xf32, #tpu.memory_space<vmem>>, vector<8x128xf32>,
    return
  }
  func.func @transform_0(%arg0: i32) -> (i32, i32) {
    %c0_i32 = arith.constant 0 : i32
    %c0_i32_0 = arith.constant 0 : i32
    %c0_i32_1 = arith.constant 0 : i32
    return %c0_i32, %c0_i32_0 : i32, i32
  }
  func.func @transform_1(%arg0: i32) -> (i32, i32) {
    %c0_i32 = arith.constant 0 : i32
    %c0_i32_0 = arith.constant 0 : i32
    %c0_i32_1 = arith.constant 0 : i32
    return %c0_i32, %c0_i32_0 : i32, i32
  }
  func.func @transform_2(%arg0: i32) -> (i32, i32) {
    %c0_i32 = arith.constant 0 : i32
    %c0_i32_0 = arith.constant 0 : i32
    %c0_i32_1 = arith.constant 0 : i32
    return %c0_i32, %c0_i32_0 : i32, i32
  }
}

module attributes {stable_mosaic.version = 11 : i64} {
  func.func @kernel(%arg0: i32, %arg1: memref<8x32xf32, #tpu.memory_space<vmem>>, %arg2: memref<32x128xf32, #tpu.memory_space<vmem>>, %arg3: memref<1x128xf32, #tpu.memory_space<vmem>>, %arg4: memref<1x128xf32, #tpu.memory_space<vmem>>, %arg5: memref<1x128xf32, #tpu.memory_space<vmem>>, %arg6: memref<8x128xf32, #tpu.memory_space<vmem>>) attributes {dimension_semantics = [#tpu.dimension_semantics<parallel>], iteration_bounds = array<i64: 1>, scalar_prefetch = 0 : i64, scratch_operands = 0 : i64, tpu.core_type = #tpu.core_type<tc>, window_params = [{transform_indices = @transform_0, window_bounds = array<i64: 8, 32>}, {pipeline_mode = #tpu.pipeline_mode<synchronous>, transform_indices = @transform_1, window_bounds = array<i64: 32, 128>}, {pipeline_mode = #tpu.pipeline_mode<synchronous>, transform_indices = @transform_2, window_bounds = array<i64: 1, 128>}, {pipeline_mode = #tpu.pipeline_mode<synchronous>, transform_indices = @transform_3, window_bounds = array<i64: 1, 128>}, {pipeline_mode = #tpu.pipeline_mode<synchronous>, transform_indices = @transform_4, window_bounds = array<i64: 1, 128>}, {transform_indices = @transform_5, window_bounds = array<i64: 8, 128>}]} {
    %c0 = arith.constant 0 : index
    %c0_0 = arith.constant 0 : index
    %0 = vector.load %arg1[%c0, %c0_0] : memref<8x32xf32, #tpu.memory_space<vmem>>, vector<8x32xf32>
    %c0_1 = arith.constant 0 : index
    %c0_2 = arith.constant 0 : index
    %1 = vector.load %arg2[%c0_1, %c0_2] : memref<32x128xf32, #tpu.memory_space<vmem>>, vector<32x128xf32>
    %cst = arith.constant dense<0.000000e+00> : vector<8x128xf32>
    %2 = tpu.matmul %0, %1, %cst {dimension_numbers = #tpu.dot_dimension_numbers<[1], [0], [0], [1], [0, 0, 1, 1], [], []>} : vector<8x32xf32>, vector<32x128xf32>, vector<8x128xf32> -> vector<8x128xf32>
    %c0_3 = arith.constant 0 : index
    %c0_4 = arith.constant 0 : index
    %3 = vector.load %arg3[%c0_3, %c0_4] : memref<1x128xf32, #tpu.memory_space<vmem>>, vector<1x128xf32>
    %4 = vector.broadcast %3 : vector<1x128xf32> to vector<8x128xf32>
    %5 = arith.addf %2, %4 : vector<8x128xf32>
    %cst_5 = arith.constant dense<0.000000e+00> : vector<8xf32>
    %6 = vector.multi_reduction <add>, %5, %cst_5 [1] : vector<8x128xf32> to vector<8xf32>
    %7 = vector.shape_cast %6 : vector<8xf32> to vector<8x1xf32>
    %8 = arith.mulf %5, %5 : vector<8x128xf32>
    %cst_6 = arith.constant dense<0.000000e+00> : vector<8xf32>
    %9 = vector.multi_reduction <add>, %8, %cst_6 [1] : vector<8x128xf32> to vector<8xf32>
    %10 = vector.shape_cast %9 : vector<8xf32> to vector<8x1xf32>
    %cst_7 = arith.constant 7.812500e-03 : f32
    %11 = vector.broadcast %cst_7 : f32 to vector<8x1xf32>
    %12 = arith.mulf %7, %11 : vector<8x1xf32>
    %cst_8 = arith.constant 7.812500e-03 : f32
    %13 = vector.broadcast %cst_8 : f32 to vector<8x1xf32>
    %14 = arith.mulf %10, %13 : vector<8x1xf32>
    %15 = arith.mulf %12, %12 : vector<8x1xf32>
    %16 = arith.subf %14, %15 : vector<8x1xf32>
    %cst_9 = arith.constant 0.000000e+00 : f32
    %17 = vector.broadcast %cst_9 : f32 to vector<8x1xf32>
    %18 = arith.maximumf %16, %17 : vector<8x1xf32>
    %cst_10 = arith.constant 9.99999974E-6 : f32
    %19 = vector.broadcast %cst_10 : f32 to vector<8x1xf32>
    %20 = arith.addf %18, %19 : vector<8x1xf32>
    %21 = math.rsqrt %20 : vector<8x1xf32>
    %22 = vector.broadcast %12 : vector<8x1xf32> to vector<8x128xf32>
    %23 = arith.subf %5, %22 : vector<8x128xf32>
    %c0_11 = arith.constant 0 : index
    %c0_12 = arith.constant 0 : index
    %24 = vector.load %arg4[%c0_11, %c0_12] : memref<1x128xf32, #tpu.memory_space<vmem>>, vector<1x128xf32>
    %25 = vector.broadcast %21 : vector<8x1xf32> to vector<8x128xf32>
    %26 = vector.broadcast %24 : vector<1x128xf32> to vector<8x128xf32>
    %27 = arith.mulf %25, %26 : vector<8x128xf32>
    %28 = arith.mulf %23, %27 : vector<8x128xf32>
    %c0_13 = arith.constant 0 : index
    %c0_14 = arith.constant 0 : index
    %29 = vector.load %arg5[%c0_13, %c0_14] : memref<1x128xf32, #tpu.memory_space<vmem>>, vector<1x128xf32>
    %30 = vector.broadcast %29 : vector<1x128xf32> to vector<8x128xf32>
    %31 = arith.addf %28, %30 : vector<8x128xf32>
    %c0_15 = arith.constant 0 : index
    %c0_16 = arith.constant 0 : index
    %32 = vector.load %arg6[%c0_15, %c0_16] : memref<8x128xf32, #tpu.memory_space<vmem>>, vector<8x128xf32>
    tpu.vector_store %arg6[%c0_15, %c0_16], %31 {strides = array<i32>} : memref<8x128xf32, #tpu.memory_space<vmem>>, vector<8x128xf32>,
    return
  }
  func.func @transform_0(%arg0: i32) -> (i32, i32) {
    %c0_i32 = arith.constant 0 : i32
    %c0_i32_0 = arith.constant 0 : i32
    return %arg0, %c0_i32 : i32, i32
  }
  func.func @transform_1(%arg0: i32) -> (i32, i32) {
    %c0_i32 = arith.constant 0 : i32
    %c0_i32_0 = arith.constant 0 : i32
    %c0_i32_1 = arith.constant 0 : i32
    return %c0_i32, %c0_i32_0 : i32, i32
  }
  func.func @transform_2(%arg0: i32) -> (i32, i32) {
    %c0_i32 = arith.constant 0 : i32
    %c0_i32_0 = arith.constant 0 : i32
    %c0_i32_1 = arith.constant 0 : i32
    return %c0_i32, %c0_i32_0 : i32, i32
  }
  func.func @transform_3(%arg0: i32) -> (i32, i32) {
    %c0_i32 = arith.constant 0 : i32
    %c0_i32_0 = arith.constant 0 : i32
    %c0_i32_1 = arith.constant 0 : i32
    return %c0_i32, %c0_i32_0 : i32, i32
  }
  func.func @transform_4(%arg0: i32) -> (i32, i32) {
    %c0_i32 = arith.constant 0 : i32
    %c0_i32_0 = arith.constant 0 : i32
    %c0_i32_1 = arith.constant 0 : i32
    return %c0_i32, %c0_i32_0 : i32, i32
  }
  func.func @transform_5(%arg0: i32) -> (i32, i32) {
    %c0_i32 = arith.constant 0 : i32
    %c0_i32_0 = arith.constant 0 : i32
    return %arg0, %c0_i32 : i32, i32
  }
}

</mosaic_0001>

<llo_original>
// kernel: tpu_custom_call.1
$region0: #{tpu_custom_call.1}
  #allocation0 [shape = 'u32[]', space=smem, size = 0x4, offset = 0x4, fixed_abs, tag = 'smem constant byte address 0x4 - core index']
  #allocation1 [shape = 'u32[144,128]{1,0:T(1,128)}', space=vmem, size = 0x12000, scoped, tag = 'internal scratch']
  %s0 = inlined_call_operand.hbm [shape: f32[8,128], index: 0, kind: input, shape index: {}]
  %s1 = inlined_call_operand.hbm [shape: f32[8,128], index: 1, kind: input, shape index: {}]
  %s2 = inlined_call_operand.hbm [shape: f32[8,128], index: 2, kind: output, shape index: {}]
  %s3 = sld [smem:[#allocation0]]
  $region26: #{tpu_custom_call.1} parent=0
    _
  %s5 = ssub.s32 1, %s3
  %s6 = scalar_select 0, %s5, %s3
  $region1: #{tpu_custom_call.1} parent=0
    #allocation2 [shape = 'u8[4096]{0}', space=vmem, size = 0x1000, scoped, tag = 'input window, operand 0, single buffered']
    #allocation3 [shape = 's32[1]{0}', space=sflag, size = 0x4, scoped, tag = 'scoped memory for tpu_custom_call.1']
    #allocation4 [shape = 's32[1]{0}', space=sflag, size = 0x4, scoped, tag = 'scoped memory for tpu_custom_call.1']
    #allocation5 [shape = 'u8[4096]{0}', space=vmem, size = 0x1000, scoped, tag = 'input window, operand 1, single buffered']
    #allocation6 [shape = 's32[1]{0}', space=sflag, size = 0x4, scoped, tag = 'scoped memory for tpu_custom_call.1']
    #allocation7 [shape = 'u8[4096]{0}', space=vmem, size = 0x1000, scoped, tag = 'output window, operand 0, single buffered']
    %7 = vsyncpa [#allocation3], 0
    %8 = vsyncpa [#allocation6], 0
    %9 = vsyncpa [#allocation4], 0
    // Predicated region
    $region2: #{tpu_custom_call.1} parent=1 // pred_check
      _
    $region3: #{tpu_custom_call.1} parent=1 // pred_check_branch
      %11 = sbr.rel (0) target = $region5
    $region4: #{tpu_custom_call.1} parent=1 // pred_region
      %s13 = ssub.s32 128, 128
      %14 = vsyncadd [#allocation3], %s13
      %s16 = sshll.u32 [#allocation2], 4
      %s17 = int_to_ptr.vmem [resolvable:$true] %s16
      %19 = dma.hbm_to_vmem [thread:$0]  %s0, 128, %s17, [#allocation3]
    $region5: #{tpu_custom_call.1} parent=1 // pred_fallthru
      _
    // Predicated region
    $region6: #{tpu_custom_call.1} parent=1 // pred_check
      _
    $region7: #{tpu_custom_call.1} parent=1 // pred_check_branch
      %21 = sbr.rel (0) target = $region9
    $region8: #{tpu_custom_call.1} parent=1 // pred_region
      %s23 = ssub.s32 128, 128
      %24 = vsyncadd [#allocation6], %s23
      %s26 = sshll.u32 [#allocation5], 4
      %s27 = int_to_ptr.vmem [resolvable:$true] %s26
      %29 = dma.hbm_to_vmem [thread:$0]  %s1, 128, %s27, [#allocation6]
    $region9: #{tpu_custom_call.1} parent=1 // pred_fallthru
      _
    // Predicated region
    $region10: #{tpu_custom_call.1} parent=1 // pred_check
      _
    $region11: #{tpu_custom_call.1} parent=1 // pred_check_branch
      %31 = sbr.rel (0) target = $region13
    $region12: #{tpu_custom_call.1} parent=1 // pred_region
      %32 = dma.done [#allocation3], 128
    $region13: #{tpu_custom_call.1} parent=1 // pred_fallthru
      _
    // Predicated region
    $region14: #{tpu_custom_call.1} parent=1 // pred_check
      _
    $region15: #{tpu_custom_call.1} parent=1 // pred_check_branch
      %34 = sbr.rel (0) target = $region17
    $region16: #{tpu_custom_call.1} parent=1 // pred_region
      %35 = dma.done [#allocation6], 128
    $region17: #{tpu_custom_call.1} parent=1 // pred_fallthru
      _
    %v36 = vld [vmem:[#allocation2] sm:$0xff]
    %v37 = vld [vmem:[#allocation5] sm:$0xff]
    %v38 = vadd.f32 %v36, %v37
    %39 = vst [vmem:[#allocation7] sm:$0xff] %v38
    // Predicated region
    $region18: #{tpu_custom_call.1} parent=1 // pred_check
      _
    $region19: #{tpu_custom_call.1} parent=1 // pred_check_branch
      %41 = sbr.rel (0) target = $region21
    $region20: #{tpu_custom_call.1} parent=1 // pred_region
      %s43 = ssub.s32 128, 128
      %44 = vsyncadd [#allocation4], %s43
      %s46 = sshll.u32 [#allocation7], 4
      %s47 = int_to_ptr.vmem [resolvable:$true] %s46
      %49 = dma.vmem_to_hbm [thread:$0]  %s47, 128, %s2, [#allocation4]
    $region21: #{tpu_custom_call.1} parent=1 // pred_fallthru
      _
    // Predicated region
    $region22: #{tpu_custom_call.1} parent=1 // pred_check
      _
    $region23: #{tpu_custom_call.1} parent=1 // pred_check_branch
      %51 = sbr.rel (0) target = $region25
    $region24: #{tpu_custom_call.1} parent=1 // pred_region
      %52 = dma.done [#allocation4], 128
    $region25: #{tpu_custom_call.1} parent=1 // pred_fallthru
      _
    %53 = vsyncpa [#allocation3], 1
    %54 = vsyncpa [#allocation6], 1
    %55 = vsyncpa [#allocation4], 1

// kernel: tpu_custom_call.1
$region0: #{tpu_custom_call.1}
  #allocation0 [shape = 'u32[]', space=smem, size = 0x4, offset = 0x4, fixed_abs, tag = 'smem constant byte address 0x4 - core index']
  #allocation1 [shape = 'u32[144,128]{1,0:T(1,128)}', space=vmem, size = 0x12000, scoped, tag = 'internal scratch']
  %s0 = inlined_call_operand.hbm [shape: f32[8,32], index: 0, kind: input, shape index: {}]
  %s1 = inlined_call_operand.hbm [shape: f32[32,128], index: 1, kind: input, shape index: {}]
  %s2 = inlined_call_operand.vmem [shape: f32[1,128], index: 2, kind: input, shape index: {}]
  %s3 = inlined_call_operand.vmem [shape: f32[1,128], index: 3, kind: input, shape index: {}]
  %s4 = inlined_call_operand.vmem [shape: f32[1,128], index: 4, kind: input, shape index: {}]
  %s5 = inlined_call_operand.hbm [shape: f32[8,128], index: 5, kind: output, shape index: {}]
  %s6 = sld [smem:[#allocation0]]
  $region38: #{tpu_custom_call.1} parent=0
    _
  %s8 = ssub.s32 1, %s6
  %s9 = scalar_select 0, %s8, %s6
  $region1: #{tpu_custom_call.1} parent=0
    #allocation2 [shape = 'u8[4096]{0}', space=vmem, size = 0x1000, scoped, tag = 'input window, operand 0, single buffered']
    #allocation3 [shape = 's32[1]{0}', space=sflag, size = 0x4, scoped, tag = 'scoped memory for tpu_custom_call.1']
    #allocation4 [shape = 's32[1]{0}', space=sflag, size = 0x4, scoped, tag = 'scoped memory for tpu_custom_call.1']
    #allocation5 [shape = 'u8[16384]{0}', space=vmem, size = 0x4000, scoped, tag = 'input window, operand 1, single buffered']
    #allocation6 [shape = 's32[1]{0}', space=sflag, size = 0x4, scoped, tag = 'scoped memory for tpu_custom_call.1']
    #allocation7 [shape = 'u8[4096]{0}', space=vmem, size = 0x1000, scoped, tag = 'output window, operand 0, single buffered']
    %10 = vsyncpa [#allocation3], 0
    %11 = vsyncpa [#allocation6], 0
    %12 = vsyncpa [#allocation4], 0
    // Predicated region
    $region2: #{tpu_custom_call.1} parent=1 // pred_check
      _
    $region3: #{tpu_custom_call.1} parent=1 // pred_check_branch
      %14 = sbr.rel (0) target = $region5
    $region4: #{tpu_custom_call.1} parent=1 // pred_region
      %s16 = ssub.s32 128, 128
      %17 = vsyncadd [#allocation3], %s16
      %s19 = sshll.u32 [#allocation2], 4
      %s20 = int_to_ptr.vmem [resolvable:$true] %s19
      %22 = dma.hbm_to_vmem [thread:$0]  %s0, 128, %s20, [#allocation3]
    $region5: #{tpu_custom_call.1} parent=1 // pred_fallthru
      _
    // Predicated region
    $region6: #{tpu_custom_call.1} parent=1 // pred_check
      _
    $region7: #{tpu_custom_call.1} parent=1 // pred_check_branch
      %24 = sbr.rel (0) target = $region9
    $region8: #{tpu_custom_call.1} parent=1 // pred_region
      %s26 = ssub.s32 512, 512
      %27 = vsyncadd [#allocation6], %s26
      %s28 = sshll.u32 [#allocation5], 4
      %s29 = int_to_ptr.vmem [resolvable:$true] %s28
      %34 = dma.hbm_to_vmem [thread:$0]  %s1, 512, %s29, [#allocation6], 128, 128, 8
    $region9: #{tpu_custom_call.1} parent=1 // pred_fallthru
      _
    // Predicated region
    $region10: #{tpu_custom_call.1} parent=1 // pred_check
      _
    $region11: #{tpu_custom_call.1} parent=1 // pred_check_branch
      %36 = sbr.rel (0) target = $region13
    $region12: #{tpu_custom_call.1} parent=1 // pred_region
      _
    $region13: #{tpu_custom_call.1} parent=1 // pred_fallthru
      _
    // Predicated region
    $region14: #{tpu_custom_call.1} parent=1 // pred_check
      _
    $region15: #{tpu_custom_call.1} parent=1 // pred_check_branch
      %38 = sbr.rel (0) target = $region17
    $region16: #{tpu_custom_call.1} parent=1 // pred_region
      _
    $region17: #{tpu_custom_call.1} parent=1 // pred_fallthru
      _
    // Predicated region
    $region18: #{tpu_custom_call.1} parent=1 // pred_check
      _
    $region19: #{tpu_custom_call.1} parent=1 // pred_check_branch
      %40 = sbr.rel (0) target = $region21
    $region20: #{tpu_custom_call.1} parent=1 // pred_region
      _
    $region21: #{tpu_custom_call.1} parent=1 // pred_fallthru
      _
    // Predicated region
    $region22: #{tpu_custom_call.1} parent=1 // pred_check
      _
    $region23: #{tpu_custom_call.1} parent=1 // pred_check_branch
      %42 = sbr.rel (0) target = $region25
    $region24: #{tpu_custom_call.1} parent=1 // pred_region
      %43 = dma.done [#allocation3], 128
    $region25: #{tpu_custom_call.1} parent=1 // pred_fallthru
      _
    // Predicated region
    $region26: #{tpu_custom_call.1} parent=1 // pred_check
      _
    $region27: #{tpu_custom_call.1} parent=1 // pred_check_branch
      %45 = sbr.rel (0) target = $region29
    $region28: #{tpu_custom_call.1} parent=1 // pred_region
      %46 = dma.done [#allocation6], 512
    $region29: #{tpu_custom_call.1} parent=1 // pred_fallthru
      _
    %v47 = vld [vmem:[#allocation2] sm:$0xff]
    %v48 = vld [vmem:[#allocation5] sm:$0xff]
    %v49 = vld [vmem:[#allocation5 + $0x8] sm:$0xff]
    %v50 = vld [vmem:[#allocation5 + $0x10] sm:$0xff]
    %v51 = vld [vmem:[#allocation5 + $0x18] sm:$0xff]
    %v52 = vld [vmem:[%s2] sm:$0x1]
    %v54 = vlaneseq
    %v55 = vshrl.u32 %v54, 7
    %v56 = vsub.s32 0, %v55
    %v57 = vrot.slane %v52, %v56
    %vm59 = vcmask 261120
    %v61 = vsel %vm59, %v47, 0
    %63 = vmatprep.subr.mxu0 0.0
    %64 = vmatpush1.msra.mxu0 %v48
    %65 = vmatprep.subr.mxu0 0.0
    %66 = vmatpush1.msra.mxu0 %v49
    %67 = vmatprep.subr.mxu0 0.0
    %68 = vmatpush1.msra.mxu0 %v50
    %69 = vmatprep.subr.mxu0 0.0
    %70 = vmatpush1.msra.mxu0 %v51
    %71 = vmatprep.subr.mxu0 0.0
    %72 = vmatpush1.msra.mxu0 0.0
    %73 = vmatprep.subr.mxu0 0.0
    %74 = vmatpush1.msra.mxu0 0.0
    %75 = vmatprep.subr.mxu0 0.0
    %76 = vmatpush1.msra.mxu0 0.0
    %77 = vmatprep.subr.mxu0 0.0
    %78 = vmatpush1.msra.mxu0 0.0
    %79 = vmatprep.subr.mxu0 0.0
    %80 = vmatpush1.msra.mxu0 0.0
    %81 = vmatprep.subr.mxu0 0.0
    %82 = vmatpush1.msra.mxu0 0.0
    %83 = vmatprep.subr.mxu0 0.0
    %84 = vmatpush1.msra.mxu0 0.0
    %85 = vmatprep.subr.mxu0 0.0
    %86 = vmatpush1.msra.mxu0 0.0
    %87 = vmatprep.subr.mxu0 0.0
    %88 = vmatpush1.msra.mxu0 0.0
    %89 = vmatprep.subr.mxu0 0.0
    %90 = vmatpush1.msra.mxu0 0.0
    %91 = vmatprep.subr.mxu0 0.0
    %92 = vmatpush1.msra.mxu0 0.0
    %93 = vmatprep.subr.mxu0 0.0
    %94 = vmatpush1.msra.mxu0 0.0
    %95 = vmatprep.subr.mxu0 0.0
    %96 = vmatpush1.msra.mxu0 0.0
    %97 = vmatprep.subr.mxu0 0.0
    %98 = vmatpush1.msra.mxu0 0.0
    %99 = vmatprep.subr.mxu0 0.0
    %100 = vmatpush1.msra.mxu0 0.0
    %101 = vmatprep.subr.mxu0 0.0
    %102 = vmatpush1.msra.mxu0 0.0
    %103 = vmatprep.subr.mxu0 0.0
    %104 = vmatpush1.msra.mxu0 0.0
    %105 = vmatprep.subr.mxu0 0.0
    %106 = vmatpush1.msra.mxu0 0.0
    %107 = vmatprep.subr.mxu0 0.0
    %108 = vmatpush1.msra.mxu0 0.0
    %109 = vmatprep.subr.mxu0 0.0
    %110 = vmatpush1.msra.mxu0 0.0
    %111 = vmatprep.subr.mxu0 0.0
    %112 = vmatpush1.msra.mxu0 0.0
    %113 = vmatprep.subr.mxu0 0.0
    %114 = vmatpush1.msra.mxu0 0.0
    %115 = vmatprep.subr.mxu0 0.0
    %116 = vmatpush1.msra.mxu0 0.0
    %117 = vmatprep.subr.mxu0 0.0
    %118 = vmatpush1.msra.mxu0 0.0
    %119 = vmatprep.subr.mxu0 0.0
    %120 = vmatpush1.msra.mxu0 0.0
    %121 = vmatprep.subr.mxu0 0.0
    %122 = vmatpush1.msra.mxu0 0.0
    %123 = vmatprep.subr.mxu0 0.0
    %124 = vmatpush1.msra.mxu0 0.0
    %125 = vmatprep.subr.mxu0 0.0
    %126 = vmatpush1.msra.mxu0 0.0
    %127 = vmatprep.mubr.f32.mxu0 0.0
    %128 = vmatmul.mubr.f32.gmra.mrb[0].mxu0 %v61
    %v129 = vpop.f32.mrb[0].mxu0
    %v130 = vadd.f32 %v57, %v129
    %v131 = vpop.f32.mrb[0].mxu0
    %132 = vdwg.mxu0
    %133 = vadd.xlane.f32.xlu0 %v130
    %v134 = vpop.xlane.xlu0 %133
    %v135 = vmul.f32 %v130, %v130
    %136 = vadd.xlane.f32.xlu0 %v135
    %v137 = vpop.xlane.xlu0 %136
    %v138 = vmul.f32 %v134, 0.0078125
    %v139 = vmul.f32 %v137, 0.0078125
    %v140 = vmul.f32 %v138, %v138
    %v141 = vsub.f32 %v139, %v140
    %v142 = vmax.f32 %v141, 0.0
    %v143 = vadd.f32 %v142, 1e-05
    %v144 = vrsqrt.pop %v143
    %v145 = vsub.f32 %v130, %v138
    %v146 = vld [vmem:[%s3] sm:$0x1]
    %v148 = vlaneseq
    %v149 = vshrl.u32 %v148, 7
    %v150 = vsub.s32 0, %v149
    %v151 = vrot.slane %v146, %v150
    %v153 = vmul.f32 %v144, %v151
    %v154 = vmul.f32 %v145, %v153
    %v155 = vld [vmem:[%s4] sm:$0x1]
    %v157 = vlaneseq
    %v158 = vshrl.u32 %v157, 7
    %v159 = vsub.s32 0, %v158
    %v160 = vrot.slane %v155, %v159
    %v162 = vadd.f32 %v154, %v160
    %163 = vst [vmem:[#allocation7] sm:$0xff] %v162
    // Predicated region
    $region30: #{tpu_custom_call.1} parent=1 // pred_check
      _
    $region31: #{tpu_custom_call.1} parent=1 // pred_check_branch
      %165 = sbr.rel (0) target = $region33
    $region32: #{tpu_custom_call.1} parent=1 // pred_region
      %s167 = ssub.s32 128, 128
      %168 = vsyncadd [#allocation4], %s167
      %s170 = sshll.u32 [#allocation7], 4
      %s171 = int_to_ptr.vmem [resolvable:$true] %s170
      %173 = dma.vmem_to_hbm [thread:$0]  %s171, 128, %s5, [#allocation4]
    $region33: #{tpu_custom_call.1} parent=1 // pred_fallthru
      _
    // Predicated region
    $region34: #{tpu_custom_call.1} parent=1 // pred_check
      _
    $region35: #{tpu_custom_call.1} parent=1 // pred_check_branch
      %175 = sbr.rel (0) target = $region37
    $region36: #{tpu_custom_call.1} parent=1 // pred_region
      %176 = dma.done [#allocation4], 128
    $region37: #{tpu_custom_call.1} parent=1 // pred_fallthru
      _
    %177 = vsyncpa [#allocation3], 1
    %178 = vsyncpa [#allocation6], 1
    %179 = vsyncpa [#allocation4], 1

</llo_original>
